<compile_context>
chip_gen: v5e
topology: v5e:2x2
jax: 0.10.0
libtpu: 0.0.40
codegen_flags: <defaults>
</compile_context>

<pallas_src>
import functools

import numpy as np
import jax
import jax.numpy as jnp
from jax.experimental import pallas as pl
from jax.experimental.pallas import tpu as pltpu


def _round_up(v, m):
    return (v + m - 1) // m * m


def _cdiv(a, b):
    return -(-a // b)


def _vmem_capacity_bytes():
    try:
        info = pltpu.get_tpu_info()
        cap = getattr(info, "vmem_capacity_bytes", None)
        if cap:
            return int(cap)
    except Exception:
        pass
    return 64 * 1024 * 1024   # conservative: v7x physical VMEM per TC


def _bell_kernel(stepj_ref, stepk_ref, first_ref, last_ref, active_ref,
                 x_ref, w_ref, b_ref, o_ref, acc_ref, *, x_resident):
    """One flattened block-ELL step.

    stepj/stepk/first/last/active : SMEM int32 schedule (scalar prefetch).
    x_ref : resident (KT, tm, tk) K-panel, or streamed (tm, tk) tile (bf16).
    w_ref : (tk, tn) tile of 2*(W*mask)^T (bf16).  b_ref: (1, tn) bias.
    o_ref : (tm, tn) output.  acc_ref: (tm, tn) f32 scratch.
    """
    s = pl.program_id(1)

    @pl.when(first_ref[s] == 1)
    def _():
        acc_ref[...] = jnp.zeros_like(acc_ref)

    @pl.when(active_ref[s] == 1)
    def _():
        if x_resident:
            x_tile = x_ref[stepk_ref[s]]           # dynamic leading-dim index
        else:
            x_tile = x_ref[...]
        acc_ref[...] += jnp.dot(x_tile, w_ref[...],
                                preferred_element_type=jnp.float32)

    @pl.when(last_ref[s] == 1)
    def _():
        # x_sparse + x_dense == 2*(x @ W_masked^T) + bias; the x2 is folded into w.
        o_ref[...] = (acc_ref[...] + b_ref[...].astype(jnp.float32)
                      ).astype(o_ref.dtype)


def prepare_blocked_ell_linear(weight, bias, block_mask, block_size=(16, 16),
                               tn=512, tk=256, compute_dtype=jnp.bfloat16):
    """Init-time prep (run ONCE per module): apply block mask, fold the x2,
    transpose to (K, N), cast to bf16, pad to tile multiples, pad bias, and
    build the flattened block-ELL schedule.  Nothing here runs per forward."""
    N, K = weight.shape
    bn, bk = block_size
    assert N % bn == 0 and K % bk == 0, "features must be multiples of block_size"
    NB, KB = N // bn, K // bk
    out_dtype = weight.dtype

    N_r = _round_up(N, 128)
    K_r = _round_up(K, 128)
    tn = min(_round_up(tn, 128), N_r)
    tk = min(_round_up(tk, 128), K_r)
    N_pad = _round_up(N_r, tn)
    K_pad = _round_up(K_r, tk)
    NJ, KT = N_pad // tn, K_pad // tk

    # One device->host sync, at init only.
    mask_np = np.asarray(jax.device_get(block_mask)).astype(bool).reshape(NB, KB)
    dense_mask = jnp.asarray(
        np.repeat(np.repeat(mask_np, bn, axis=0), bk, axis=1), weight.dtype)

    # 2*(W*mask)^T, bf16, padded, lane-dense along N.
    w_prep = (2.0 * (weight * dense_mask)).T.astype(compute_dtype)
    w_p = jnp.zeros((K_pad, N_pad), compute_dtype).at[:K, :N].set(w_prep)
    b_p = jnp.zeros((1, N_pad), out_dtype).at[0, :N].set(bias.astype(out_dtype))

    # Flattened (ragged) schedule: one grid step per active (N-tile, K-tile);
    # N-tiles with no active K-tile get a single inactive "bias only" step.
    step_j, step_k, step_first, step_last, step_active = [], [], [], [], []
    for j in range(NJ):
        r0 = (j * tn) // bn
        r1 = min(_cdiv((j + 1) * tn, bn), NB)
        active = []
        for kt in range(KT):
            c0 = (kt * tk) // bk
            c1 = min(_cdiv((kt + 1) * tk, bk), KB)
            if r0 < NB and c0 < KB and mask_np[r0:r1, c0:c1].any():
                active.append(kt)
        if not active:
            step_j.append(j); step_k.append(0)
            step_first.append(1); step_last.append(1); step_active.append(0)
            continue
        for idx, kt in enumerate(active):
            step_j.append(j); step_k.append(kt)
            step_first.append(1 if idx == 0 else 0)
            step_last.append(1 if idx == len(active) - 1 else 0)
            step_active.append(1)

    sched = dict(
        step_j=jnp.asarray(step_j, jnp.int32),
        step_k=jnp.asarray(step_k, jnp.int32),
        step_first=jnp.asarray(step_first, jnp.int32),
        step_last=jnp.asarray(step_last, jnp.int32),
        step_active=jnp.asarray(step_active, jnp.int32),
    )
    return dict(
        w_p=w_p, b_p=b_p, sched=sched,
        N=N, K=K, N_pad=N_pad, K_pad=K_pad, tn=tn, tk=tk, NJ=NJ, KT=KT,
        n_steps=len(step_j), n_active=int(np.sum(step_active)),
        compute_dtype=compute_dtype, out_dtype=out_dtype,
    )


def blocked_ell_linear(prep, x):
    """Forward: out[..., N] = 2 * (x @ (W*mask)^T) + bias   (jit-friendly)."""
    N, K = prep["N"], prep["K"]
    tn, tk = prep["tn"], prep["tk"]
    K_pad, N_pad = prep["K_pad"], prep["N_pad"]
    KT = prep["KT"]
    n_steps = prep["n_steps"]
    cdtype, odtype = prep["compute_dtype"], prep["out_dtype"]

    *lead, K_in = x.shape
    assert K_in == K, "in_features mismatch"
    x2 = x.reshape(-1, K).astype(cdtype)
    M = x2.shape[0]

    # ---- M tiling: minimal padding, single M-tile when it fits ----
    budget = int(0.75 * _vmem_capacity_bytes())
    M_r = _round_up(M, 8)
    if M_r <= 1024:
        tm, M_pad = M_r, M_r
    else:
        tm = 1024 if budget >= 80 * (1 << 20) else 512   # v5e/v6e vs v7x VMEM
        M_pad = _round_up(M, tm)
    MI = M_pad // tm

    if M_pad != M or K_pad != K:
        x_p = jnp.zeros((M_pad, K_pad), cdtype).at[:M, :K].set(x2)
    else:
        x_p = x2

    # ---- keep the x K-panel resident in VMEM if it fits the budget ----
    c_item = jnp.dtype(cdtype).itemsize
    o_item = jnp.dtype(odtype).itemsize
    resident_need = (2 * tm * K_pad * c_item      # x panel (double-buffered)
                     + 2 * tk * tn * c_item       # weight tile
                     + 2 * tm * tn * o_item       # output tile
                     + tm * tn * 4                # f32 accumulator
                     + 2 * tn * o_item)           # bias tile
    x_resident = resident_need <= budget

    if x_resident:
        # (KT, M_pad, tk): per-step K-tile select is a leading-dim dynamic index.
        x_in = x_p.reshape(M_pad, KT, tk).transpose(1, 0, 2)
        x_spec = pl.BlockSpec((KT, tm, tk), lambda i, s, *_: (0, i, 0))
    else:
        x_in = x_p
        x_spec = pl.BlockSpec((tm, tk), lambda i, s, sj, sk, *_: (i, sk[s]))

    w_spec = pl.BlockSpec((tk, tn), lambda i, s, sj, sk, *_: (sk[s], sj[s]))
    b_spec = pl.BlockSpec((1, tn), lambda i, s, sj, *_: (0, sj[s]))
    o_spec = pl.BlockSpec((tm, tn), lambda i, s, sj, *_: (i, sj[s]))

    cost = pl.CostEstimate(
        flops=2 * M_pad * tk * tn * prep["n_active"],
        transcendentals=0,
        bytes_accessed=(M_pad * K_pad * c_item
                        + MI * prep["n_active"] * tk * tn * c_item
                        + M_pad * N_pad * o_item))

    sched = prep["sched"]
    out = pl.pallas_call(
        functools.partial(_bell_kernel, x_resident=x_resident),
        out_shape=jax.ShapeDtypeStruct((M_pad, N_pad), odtype),
        grid_spec=pltpu.PrefetchScalarGridSpec(
            num_scalar_prefetch=5,                 # step_j, step_k, first, last, active
            grid=(MI, n_steps),                    # flattened ragged reduction innermost
            in_specs=[x_spec, w_spec, b_spec],
            out_specs=o_spec,
            scratch_shapes=[pltpu.VMEM((tm, tn), jnp.float32)],
        ),
        compiler_params=pltpu.CompilerParams(
            dimension_semantics=("parallel", "arbitrary"),
            vmem_limit_bytes=budget),
        cost_estimate=cost,
    )(sched["step_j"], sched["step_k"], sched["step_first"],
      sched["step_last"], sched["step_active"],
      x_in, prep["w_p"], prep["b_p"])

    return out[:M, :N].reshape(*lead, N)


if __name__ == "__main__":
    key = jax.random.PRNGKey(0)
    in_features, out_features = 256, 256
    block_size = (16, 16)
    NB, KB = out_features // block_size[0], in_features // block_size[1]

    kw, kb, kx, kmask = jax.random.split(key, 4)

    # Deterministic block mask that exercises every schedule path:
    #  - upper half of output blocks: random active blocks (multi-step K reduction)
    #  - lower half of output blocks: all inactive (bias-only output tile)
    mask = jax.random.bernoulli(kmask, 0.5, (NB, KB))
    mask = mask.at[0, 0].set(True)            # guarantee >= 1 active block
    block_mask = mask.at[NB // 2:, :].set(False)

    w = jax.random.normal(kw, (out_features, in_features), jnp.float32) * 0.05
    bias = jax.random.normal(kb, (out_features,), jnp.float32) * 0.05
    x = jax.random.normal(kx, (2, 4, in_features), jnp.float32)

    # Init-time prep; small tiles here so the demo exercises multi-tile scheduling.
    prep = prepare_blocked_ell_linear(w, bias, block_mask, block_size,
                                      tn=128, tk=128)

    fwd = jax.jit(lambda xx: blocked_ell_linear(prep, xx))
    y = jax.block_until_ready(fwd(x))

    # Reference: x_sparse + x_dense == 2 * (x @ W_masked^T) + bias, with the same
    # bf16 operand rounding / f32 accumulation as the kernel.
    dense_mask = jnp.repeat(jnp.repeat(block_mask, block_size[0], axis=0),
                            block_size[1], axis=1).astype(jnp.float32)
    w_masked = (w * dense_mask).astype(jnp.bfloat16)
    ref = 2.0 * jnp.einsum("bsk,nk->bsn", x.astype(jnp.bfloat16), w_masked,
                           preferred_element_type=jnp.float32) + bias
    err = float(jnp.max(jnp.abs(y - ref)))
    assert jnp.allclose(y, ref, atol=2e-3, rtol=2e-3), err
    print("KERNEL_OK")
</pallas_src>

<mosaic_0001>
module attributes {stable_mosaic.version = 11 : i64} {
  func.func @_bell_kernel(%arg0: i32, %arg1: i32, %arg2: memref<3xi32, #tpu.memory_space<smem>>, %arg3: memref<3xi32, #tpu.memory_space<smem>>, %arg4: memref<3xi32, #tpu.memory_space<smem>>, %arg5: memref<3xi32, #tpu.memory_space<smem>>, %arg6: memref<3xi32, #tpu.memory_space<smem>>, %arg7: memref<2x8x128xbf16, #tpu.memory_space<vmem>>, %arg8: memref<128x128xbf16, #tpu.memory_space<vmem>>, %arg9: memref<1x128xf32, #tpu.memory_space<vmem>>, %arg10: memref<8x128xf32, #tpu.memory_space<vmem>>, %arg11: memref<8x128xf32, #tpu.memory_space<vmem>>) attributes {dimension_semantics = [#tpu.dimension_semantics<parallel>, #tpu.dimension_semantics<arbitrary>], iteration_bounds = array<i64: 1, 3>, scalar_prefetch = 5 : i64, scratch_operands = 1 : i64, tpu.core_type = #tpu.core_type<tc>, window_params = [{transform_indices = @transform_0, window_bounds = array<i64: 2, 8, 128>}, {transform_indices = @transform_1, window_bounds = array<i64: 128, 128>}, {transform_indices = @transform_2, window_bounds = array<i64: 1, 128>}, {transform_indices = @transform_3, window_bounds = array<i64: 8, 128>}]} {
    %0 = arith.index_cast %arg1 : i32 to index
    %1 = memref.load %arg4[%0] : memref<3xi32, #tpu.memory_space<smem>>
    %c1_i32 = arith.constant 1 : i32
    %2 = arith.cmpi eq, %1, %c1_i32 : i32
    %3 = arith.extui %2 : i1 to i32
    %c0_i32 = arith.constant 0 : i32
    %4 = arith.cmpi ne, %3, %c0_i32 : i32
    scf.if %4 {
      %cst = arith.constant 0.000000e+00 : f32
      %15 = vector.broadcast %cst : f32 to vector<8x128xf32>
      %c0 = arith.constant 0 : index
      %c0_4 = arith.constant 0 : index
      %16 = vector.load %arg11[%c0, %c0_4] : memref<8x128xf32, #tpu.memory_space<vmem>>, vector<8x128xf32>
      tpu.vector_store %arg11[%c0, %c0_4], %15 {strides = array<i32>} : memref<8x128xf32, #tpu.memory_space<vmem>>, vector<8x128xf32>,
    } else {
    }
    %5 = arith.index_cast %arg1 : i32 to index
    %6 = memref.load %arg6[%5] : memref<3xi32, #tpu.memory_space<smem>>
    %c1_i32_0 = arith.constant 1 : i32
    %7 = arith.cmpi eq, %6, %c1_i32_0 : i32
    %8 = arith.extui %7 : i1 to i32
    %c0_i32_1 = arith.constant 0 : i32
    %9 = arith.cmpi ne, %8, %c0_i32_1 : i32
    scf.if %9 {
      %15 = arith.index_cast %arg1 : i32 to index
      %16 = memref.load %arg3[%15] : memref<3xi32, #tpu.memory_space<smem>>
      %17 = arith.index_cast %16 : i32 to index
      %c0 = arith.constant 0 : index
      %c0_4 = arith.constant 0 : index
      %18 = vector.load %arg7[%17, %c0, %c0_4] : memref<2x8x128xbf16, #tpu.memory_space<vmem>>, vector<1x8x128xbf16>
      %19 = vector.shape_cast %18 : vector<1x8x128xbf16> to vector<8x128xbf16>
      %c0_5 = arith.constant 0 : index
      %c0_6 = arith.constant 0 : index
      %20 = vector.load %arg11[%c0_5, %c0_6] : memref<8x128xf32, #tpu.memory_space<vmem>>, vector<8x128xf32>
      %c0_7 = arith.constant 0 : index
      %c0_8 = arith.constant 0 : index
      %21 = vector.load %arg8[%c0_7, %c0_8] : memref<128x128xbf16, #tpu.memory_space<vmem>>, vector<128x128xbf16>
      %cst = arith.constant dense<0.000000e+00> : vector<8x128xf32>
      %22 = tpu.matmul %19, %21, %cst {dimension_numbers = #tpu.dot_dimension_numbers<[1], [0], [0], [1], [0, 0, 1, 1], [], []>} : vector<8x128xbf16>, vector<128x128xbf16>, vector<8x128xf32> -> vector<8x128xf32>
      %23 = arith.addf %20, %22 : vector<8x128xf32>
      %c0_9 = arith.constant 0 : index
      %c0_10 = arith.constant 0 : index
      %24 = vector.load %arg11[%c0_9, %c0_10] : memref<8x128xf32, #tpu.memory_space<vmem>>, vector<8x128xf32>
      tpu.vector_store %arg11[%c0_9, %c0_10], %23 {strides = array<i32>} : memref<8x128xf32, #tpu.memory_space<vmem>>, vector<8x128xf32>,
    } else {
    }
    %10 = arith.index_cast %arg1 : i32 to index
    %11 = memref.load %arg5[%10] : memref<3xi32, #tpu.memory_space<smem>>
    %c1_i32_2 = arith.constant 1 : i32
    %12 = arith.cmpi eq, %11, %c1_i32_2 : i32
    %13 = arith.extui %12 : i1 to i32
    %c0_i32_3 = arith.constant 0 : i32
    %14 = arith.cmpi ne, %13, %c0_i32_3 : i32
    scf.if %14 {
      %c0 = arith.constant 0 : index
      %c0_4 = arith.constant 0 : index
      %15 = vector.load %arg11[%c0, %c0_4] : memref<8x128xf32, #tpu.memory_space<vmem>>, vector<8x128xf32>
      %c0_5 = arith.constant 0 : index
      %c0_6 = arith.constant 0 : index
      %16 = vector.load %arg9[%c0_5, %c0_6] : memref<1x128xf32, #tpu.memory_space<vmem>>, vector<1x128xf32>
      %17 = vector.broadcast %16 : vector<1x128xf32> to vector<8x128xf32>
      %18 = arith.addf %15, %17 : vector<8x128xf32>
      %c0_7 = arith.constant 0 : index
      %c0_8 = arith.constant 0 : index
      %19 = vector.load %arg10[%c0_7, %c0_8] : memref<8x128xf32, #tpu.memory_space<vmem>>, vector<8x128xf32>
      tpu.vector_store %arg10[%c0_7, %c0_8], %18 {strides = array<i32>} : memref<8x128xf32, #tpu.memory_space<vmem>>, vector<8x128xf32>,
    } else {
    }
    return
  }
  func.func @transform_0(%arg0: i32, %arg1: i32, %arg2: memref<3xi32, #tpu.memory_space<smem>>, %arg3: memref<3xi32, #tpu.memory_space<smem>>, %arg4: memref<3xi32, #tpu.memory_space<smem>>, %arg5: memref<3xi32, #tpu.memory_space<smem>>, %arg6: memref<3xi32, #tpu.memory_space<smem>>) -> (i32, i32, i32) {
    %c0_i32 = arith.constant 0 : i32
    %c0_i32_0 = arith.constant 0 : i32
    %c0_i32_1 = arith.constant 0 : i32
    return %c0_i32, %arg0, %c0_i32_0 : i32, i32, i32
  }
  func.func @transform_1(%arg0: i32, %arg1: i32, %arg2: memref<3xi32, #tpu.memory_space<smem>>, %arg3: memref<3xi32, #tpu.memory_space<smem>>, %arg4: memref<3xi32, #tpu.memory_space<smem>>, %arg5: memref<3xi32, #tpu.memory_space<smem>>, %arg6: memref<3xi32, #tpu.memory_space<smem>>) -> (i32, i32) {
    %0 = arith.index_cast %arg1 : i32 to index
    %1 = memref.load %arg3[%0] : memref<3xi32, #tpu.memory_space<smem>>
    %2 = arith.index_cast %arg1 : i32 to index
    %3 = memref.load %arg2[%2] : memref<3xi32, #tpu.memory_space<smem>>
    %c0_i32 = arith.constant 0 : i32
    return %1, %3 : i32, i32
  }
  func.func @transform_2(%arg0: i32, %arg1: i32, %arg2: memref<3xi32, #tpu.memory_space<smem>>, %arg3: memref<3xi32, #tpu.memory_space<smem>>, %arg4: memref<3xi32, #tpu.memory_space<smem>>, %arg5: memref<3xi32, #tpu.memory_space<smem>>, %arg6: memref<3xi32, #tpu.memory_space<smem>>) -> (i32, i32) {
    %0 = arith.index_cast %arg1 : i32 to index
    %1 = memref.load %arg2[%0] : memref<3xi32, #tpu.memory_space<smem>>
    %c0_i32 = arith.constant 0 : i32
    %c0_i32_0 = arith.constant 0 : i32
    return %c0_i32, %1 : i32, i32
  }
  func.func @transform_3(%arg0: i32, %arg1: i32, %arg2: memref<3xi32, #tpu.memory_space<smem>>, %arg3: memref<3xi32, #tpu.memory_space<smem>>, %arg4: memref<3xi32, #tpu.memory_space<smem>>, %arg5: memref<3xi32, #tpu.memory_space<smem>>, %arg6: memref<3xi32, #tpu.memory_space<smem>>) -> (i32, i32) {
    %0 = arith.index_cast %arg1 : i32 to index
    %1 = memref.load %arg2[%0] : memref<3xi32, #tpu.memory_space<smem>>
    %c0_i32 = arith.constant 0 : i32
    return %arg0, %1 : i32, i32
  }
}

</mosaic_0001>

<llo_original>
// kernel: _lambda_.1
$region0: #{_lambda_.1}
  #allocation0 [shape = 'u32[]', space=smem, size = 0x4, offset = 0x4, fixed_abs, tag = 'smem constant byte address 0x4 - core index']
  #allocation1 [shape = 'u32[72,128]{1,0:T(1,128)}', space=vmem, size = 0x9000, scoped, tag = 'internal scratch']
  #allocation2 [shape = 'f32[8,128]{1,0:T(8,128)}', space=vmem, size = 0x1000, scoped, tag = 'scratch operand']
  #allocation3 [shape = 's32[1]{0}', space=sflag, size = 0x4, scoped, tag = 'scoped memory for _lambda_.1']
  #allocation4 [shape = 'u8[512]{0}', space=smem, size = 0x200, scoped, tag = 'prefetched SMEM operand 0']
  #allocation5 [shape = 'u8[512]{0}', space=smem, size = 0x200, scoped, tag = 'prefetched SMEM operand 1']
  #allocation6 [shape = 'u8[512]{0}', space=smem, size = 0x200, scoped, tag = 'prefetched SMEM operand 2']
  #allocation7 [shape = 'u8[512]{0}', space=smem, size = 0x200, scoped, tag = 'prefetched SMEM operand 3']
  #allocation8 [shape = 'u8[512]{0}', space=smem, size = 0x200, scoped, tag = 'prefetched SMEM operand 4']
  %s0 = inlined_call_operand.vmem [shape: s32[3], index: 0, kind: input, shape index: {}]
  %s1 = inlined_call_operand.vmem [shape: s32[3], index: 1, kind: input, shape index: {}]
  %s2 = inlined_call_operand.vmem [shape: s32[3], index: 2, kind: input, shape index: {}]
  %s3 = inlined_call_operand.vmem [shape: s32[3], index: 3, kind: input, shape index: {}]
  %s4 = inlined_call_operand.vmem [shape: s32[3], index: 4, kind: input, shape index: {}]
  %s5 = inlined_call_operand.vmem [shape: bf16[2,8,128], index: 5, kind: input, shape index: {}]
  %s6 = inlined_call_operand.hbm [shape: bf16[256,256], index: 6, kind: input, shape index: {}]
  %s7 = inlined_call_operand.vmem [shape: f32[1,256], index: 7, kind: input, shape index: {}]
  %s8 = inlined_call_operand.vmem [shape: f32[8,256], index: 8, kind: output, shape index: {}]
  %s9 = sld [smem:[#allocation0]]
  $region61: #{_lambda_.1} parent=0
    _
  %s11 = ssub.s32 1, %s9
  %s12 = scalar_select 0, %s11, %s9
  %s14 = sshll.u32 %s0, 4
  %s15 = int_to_ptr.vmem [resolvable:$true] %s14
  %17 = dma.vmem_to_smem %s15, 16, [#allocation4], [#allocation3]
  %s19 = sshll.u32 %s1, 4
  %s20 = int_to_ptr.vmem [resolvable:$true] %s19
  %22 = dma.vmem_to_smem %s20, 16, [#allocation5], [#allocation3]
  %s24 = sshll.u32 %s2, 4
  %s25 = int_to_ptr.vmem [resolvable:$true] %s24
  %27 = dma.vmem_to_smem %s25, 16, [#allocation6], [#allocation3]
  %s29 = sshll.u32 %s3, 4
  %s30 = int_to_ptr.vmem [resolvable:$true] %s29
  %32 = dma.vmem_to_smem %s30, 16, [#allocation7], [#allocation3]
  %s34 = sshll.u32 %s4, 4
  %s35 = int_to_ptr.vmem [resolvable:$true] %s34
  %37 = dma.vmem_to_smem %s35, 16, [#allocation8], [#allocation3]
  %39 = dma.done [#allocation3], 80
  %40 = sfence
  $region1: #{_lambda_.1} parent=0
    #allocation9 [shape = 'u8[65536]{0}', space=vmem, size = 0x10000, scoped, tag = 'input window, operand 6']
    #allocation10 [shape = 's32[2]{0}', space=sflag, size = 0x8, scoped, tag = 'scoped memory for _lambda_.1']
    %41 = vsyncpa [#allocation10], 0
    %s42 = scalar_lea.sflag [#allocation10], 1
    %43 = vsyncpa %s42, 0
    loop: start=0, step=1, limit=5
    $region2: #{_lambda_.1} parent=1 // loop_pre_header
      _
    $region3: #{_lambda_.1} parent=1 // loop_header
      %s45 = sphi 0, %s49
      %p46 = scmp.ge.s32.totalorder %s45, 5
      %s52 = sphi 0, %s64
      %s53 = sphi 0, %s60
      %s54 = sphi 0, %s52
      %s55 = sphi 0, %s53
      %s56 = sphi 0, %s54
      %s57 = sphi 0, %s55
      %s67 = sphi 0, %s69
      %s70 = sphi 0, %s67
      %s71 = sphi 0, %s70
      %s87 = sphi 0, %s71
      %s99 = sphi 0, %s101
      %s102 = sphi 0, %s99
      %s103 = sphi 0, %s102
      %s119 = sphi 0, %s103
      %s127 = sphi 0, %s129
      %s130 = sphi 0, %s127
      %s131 = sphi 0, %s130
      %s147 = sphi 0, %s131
      %s157 = sphi 0, %s159
      %s160 = sphi 0, %s157
      %s161 = sphi 0, %s160
      %s177 = sphi 0, %s161
    $region4: #{_lambda_.1} parent=1 // loop_header_branch
      %48 = sbr.rel (%p46) target = $region8
    $region5: #{_lambda_.1} parent=1 // loop_body
      %s50 = ssub.s32 %s45, 1
      %s51 = ssub.s32 %s45, 2
      %s58 = sadd.s32 1, %s53
      %p59 = scmp.ge.s32.totalorder %s58, 3
      %s60 = scalar_select %p59, 0, %s58
      %s61 = sadd.s32 1, %s52
      %s62 = scalar_select %p59, %s61, %s52
      %p63 = scmp.ge.s32.totalorder %s62, 1
      %s64 = scalar_select %p63, 0, %s62
      %s65 = ssub.s32 %s52, %s64
      %p66 = scmp.eq.s32.totalorder %s65, 0
      %s68 = sadd.s32 %s67, 1
      %s69 = scalar_select %p66, %s67, %s68
      %p72 = pneg %p66
      %p73 = scmp.eq.s32.totalorder %s45, 2
      %p74 = por %p72, %p73
      %p75 = scmp.ne.s32.totalorder %s67, %s70
      %p76 = scmp.eq.s32.totalorder %s45, 0
      %p77 = por %p75, %p76
      %p78 = scmp.ne.s32.totalorder %s67, %s70
      %p79 = scmp.eq.s32.totalorder %s50, 2
      %p80 = por %p78, %p79
      %p81 = scmp.ne.s32.totalorder %s70, %s71
      %p82 = scmp.eq.s32.totalorder %s50, 0
      %p83 = por %p81, %p82
      %p84 = scmp.ne.s32.totalorder %s70, %s71
      %p85 = scmp.eq.s32.totalorder %s51, 2
      %p86 = por %p84, %p85
      %p88 = scmp.ne.s32.totalorder %s71, %s87
      %p89 = scmp.eq.s32.totalorder %s51, 0
      %p90 = por %p88, %p89
      %s91 = sld [smem:[#allocation5 + %s53]]
      %s92 = sld [smem:[#allocation4 + %s53]]
      %s93 = sld [smem:[#allocation5 + %s60]]
      %s94 = sld [smem:[#allocation4 + %s60]]
      %s95 = ssub.s32 %s91, %s93
      %s96 = ssub.s32 %s92, %s94
      %s97 = sor.u32 %s95, %s96
      %p98 = scmp.eq.s32.totalorder %s97, 0
      %s100 = sadd.s32 %s99, 1
      %s101 = scalar_select %p98, %s99, %s100
      %p104 = pneg %p98
      %p105 = scmp.eq.s32.totalorder %s45, 2
      %p106 = por %p104, %p105
      %p107 = scmp.ne.s32.totalorder %s99, %s102
      %p108 = scmp.eq.s32.totalorder %s45, 0
      %p109 = por %p107, %p108
      %p110 = scmp.ne.s32.totalorder %s99, %s102
      %p111 = scmp.eq.s32.totalorder %s50, 2
      %p112 = por %p110, %p111
      %p113 = scmp.ne.s32.totalorder %s102, %s103
      %p114 = scmp.eq.s32.totalorder %s50, 0
      %p115 = por %p113, %p114
      %p116 = scmp.ne.s32.totalorder %s102, %s103
      %p117 = scmp.eq.s32.totalorder %s51, 2
      %p118 = por %p116, %p117
      %p120 = scmp.ne.s32.totalorder %s103, %s119
      %p121 = scmp.eq.s32.totalorder %s51, 0
      %p122 = por %p120, %p121
      %s123 = sld [smem:[#allocation4 + %s53]]
      %s124 = sld [smem:[#allocation4 + %s60]]
      %s125 = ssub.s32 %s123, %s124
      %p126 = scmp.eq.s32.totalorder %s125, 0
      %s128 = sadd.s32 %s127, 1
      %s129 = scalar_select %p126, %s127, %s128
      %p132 = pneg %p126
      %p133 = scmp.eq.s32.totalorder %s45, 2
      %p134 = por %p132, %p133
      %p135 = scmp.ne.s32.totalorder %s127, %s130
      %p136 = scmp.eq.s32.totalorder %s45, 0
      %p137 = por %p135, %p136
      %p138 = scmp.ne.s32.totalorder %s127, %s130
      %p139 = scmp.eq.s32.totalorder %s50, 2
      %p140 = por %p138, %p139
      %p141 = scmp.ne.s32.totalorder %s130, %s131
      %p142 = scmp.eq.s32.totalorder %s50, 0
      %p143 = por %p141, %p142
      %p144 = scmp.ne.s32.totalorder %s130, %s131
      %p145 = scmp.eq.s32.totalorder %s51, 2
      %p146 = por %p144, %p145
      %p148 = scmp.ne.s32.totalorder %s131, %s147
      %p149 = scmp.eq.s32.totalorder %s51, 0
      %p150 = por %p148, %p149
      %s151 = sld [smem:[#allocation4 + %s53]]
      %s152 = sld [smem:[#allocation4 + %s60]]
      %s153 = ssub.s32 %s52, %s64
      %s154 = ssub.s32 %s151, %s152
      %s155 = sor.u32 %s153, %s154
      %p156 = scmp.eq.s32.totalorder %s155, 0
      %s158 = sadd.s32 %s157, 1
      %s159 = scalar_select %p156, %s157, %s158
      %p162 = pneg %p156
      %p163 = scmp.eq.s32.totalorder %s45, 2
      %p164 = por %p162, %p163
      %p165 = scmp.ne.s32.totalorder %s157, %s160
      %p166 = scmp.eq.s32.totalorder %s45, 0
      %p167 = por %p165, %p166
      %p168 = scmp.ne.s32.totalorder %s157, %s160
      %p169 = scmp.eq.s32.totalorder %s50, 2
      %p170 = por %p168, %p169
      %p171 = scmp.ne.s32.totalorder %s160, %s161
      %p172 = scmp.eq.s32.totalorder %s50, 0
      %p173 = por %p171, %p172
      %p174 = scmp.ne.s32.totalorder %s160, %s161
      %p175 = scmp.eq.s32.totalorder %s51, 2
      %p176 = por %p174, %p175
      %p178 = scmp.ne.s32.totalorder %s161, %s177
      %p179 = scmp.eq.s32.totalorder %s51, 0
      %p180 = por %p178, %p179
      %p181 = scmp.le.s32.totalorder 1, %s45
      %p182 = scmp.lt.s32.totalorder %s45, 4
      %p183 = pnand %p181, %p182
      %p184 = pneg %p183
      // Predicated region
      $region9: #{_lambda_.1} parent=5 // pred_check
        _
      $region10: #{_lambda_.1} parent=5 // pred_check_branch
        %186 = sbr.rel (%p183) target = $region12
      $region11: #{_lambda_.1} parent=5 // pred_region
        %s187 = ssub.s32 %s45, 1
        // Predicated region
        $region13: #{_lambda_.1} parent=11 // pred_check
          %p188 = pneg %p83
        $region14: #{_lambda_.1} parent=11 // pred_check_branch
          %190 = sbr.rel (%p188) target = $region16
        $region15: #{_lambda_.1} parent=11 // pred_region
          %p191 = scmp.lt.s32.totalorder %s54, 0
          %s192 = scalar_select %p191, %s54, 0
          %s193 = smul.addr %s192, 4
          %s194 = scalar_lea.vmem %s5, %s193
        $region16: #{_lambda_.1} parent=11 // pred_fallthru
          _
      $region12: #{_lambda_.1} parent=5 // pred_fallthru
        _
      %p195 = scmp.lt.s32.totalorder %s45, 3
      // Predicated region
      $region17: #{_lambda_.1} parent=5 // pred_check
        %p196 = pneg %p195
      $region18: #{_lambda_.1} parent=5 // pred_check_branch
        %198 = sbr.rel (%p196) target = $region20
      $region19: #{_lambda_.1} parent=5 // pred_region
        // Predicated region
        $region21: #{_lambda_.1} parent=19 // pred_check
          %p199 = pneg %p109
        $region22: #{_lambda_.1} parent=19 // pred_check_branch
          %201 = sbr.rel (%p199) target = $region24
        $region23: #{_lambda_.1} parent=19 // pred_region
          %s202 = sand.u32 %s99, 1
          %s203 = scalar_lea.sflag [#allocation10], %s202
          %s204 = sand.u32 %s99, 1
          %s205 = smul.addr %s204, 64
          %s206 = scalar_lea.vmem [#allocation9], %s205
          %s207 = sld [smem:[#allocation5 + %s53]]
          %s208 = sld [smem:[#allocation4 + %s53]]
          %s209 = smul.u32 16, %s207
          %211 = vsyncadd %s203, 0
          %s212 = smul.addr %s209, 2
          %s213 = sadd.s32 %s208, %s212
          %s214 = smul.addr %s213, 4
          %s215 = scalar_lea.hbm %s6, %s214
          %s216 = sshll.u32 %s215, 4
          %s217 = int_to_ptr.hbm [resolvable:$true] %s216
          %s218 = sshll.u32 %s206, 4
          %s219 = int_to_ptr.vmem [resolvable:$true] %s218
          %224 = dma.hbm_to_vmem [thread:$0]  %s217, 1024, %s219, %s203, 128, 64, 4
        $region24: #{_lambda_.1} parent=19 // pred_fallthru
          _
        // Predicated region
        $region25: #{_lambda_.1} parent=19 // pred_check
          %p225 = pneg %p137
        $region26: #{_lambda_.1} parent=19 // pred_check_branch
          %227 = sbr.rel (%p225) target = $region28
        $region27: #{_lambda_.1} parent=19 // pred_region
          %s228 = sld [smem:[#allocation4 + %s53]]
          %p229 = scmp.lt.s32.totalorder %s228, 1
          %s230 = scalar_select %p229, %s228, 1
          %s231 = scalar_lea.vmem %s7, %s230
          %s232 = sld [smem:[#allocation4 + %s53]]
        $region28: #{_lambda_.1} parent=19 // pred_fallthru
          _
      $region20: #{_lambda_.1} parent=5 // pred_fallthru
        _
      %p233 = scmp.le.s32.totalorder 1, %s45
      %p234 = scmp.lt.s32.totalorder %s45, 4
      %p235 = pnand %p233, %p234
      %p236 = pneg %p235
      // Predicated region
      $region29: #{_lambda_.1} parent=5 // pred_check
        _
      $region30: #{_lambda_.1} parent=5 // pred_check_branch
        %238 = sbr.rel (%p235) target = $region32
      $region31: #{_lambda_.1} parent=5 // pred_region
        %s239 = ssub.s32 %s45, 1
        %s240 = sand.u32 %s102, 1
        %s241 = scalar_lea.sflag [#allocation10], %s240
        %s242 = sand.u32 %s102, 1
        %s243 = smul.addr %s242, 64
        %s244 = scalar_lea.vmem [#allocation9], %s243
        // Predicated region
        $region33: #{_lambda_.1} parent=31 // pred_check
          %p245 = pneg %p115
        $region34: #{_lambda_.1} parent=31 // pred_check_branch
          %247 = sbr.rel (%p245) target = $region36
        $region35: #{_lambda_.1} parent=31 // pred_region
          %249 = dma.done %s241, 1024
        $region36: #{_lambda_.1} parent=31 // pred_fallthru
          _
        %p250 = scmp.lt.s32.totalorder %s54, 0
        %s251 = scalar_select %p250, %s54, 0
        %s252 = smul.addr %s251, 4
        %s253 = scalar_lea.vmem %s5, %s252
        %p254 = pneg %p83
        %p255 = pneg %p80
        %s256 = sand.u32 %s102, 1
        %s257 = scalar_lea.sflag [#allocation10], %s256
        %s258 = sand.u32 %s102, 1
        %s259 = smul.addr %s258, 64
        %s260 = scalar_lea.vmem [#allocation9], %s259
        %p261 = pneg %p115
        %p262 = pneg %p112
        %s263 = sld [smem:[#allocation4 + %s55]]
        %p264 = scmp.lt.s32.totalorder %s263, 1
        %s265 = scalar_select %p264, %s263, 1
        %s266 = scalar_lea.vmem %s7, %s265
        %p267 = pneg %p143
        %p268 = pneg %p140
        %p269 = pneg %p173
        %p270 = pneg %p170
        %s271 = sld [smem:[#allocation4 + %s55]]
        %p272 = scmp.lt.s32.totalorder %s54, 0
        %s273 = scalar_select %p272, %s54, 0
        %p274 = scmp.lt.s32.totalorder %s271, 1
        %s275 = scalar_select %p274, %s271, 1
        %s276 = smul.addr %s273, 2
        %s277 = sadd.s32 %s275, %s276
        %s278 = smul.addr %s277, 8
        %s279 = scalar_lea.vmem %s8, %s278
        %p280 = scmp.lt.s32.totalorder %s54, 0
        %s281 = scalar_select %p280, %s54, 0
        %s282 = smul.addr %s281, 4
        %s283 = scalar_lea.vmem %s5, %s282
        %s284 = sld [smem:[#allocation5 + %s55]]
        %s285 = sld [smem:[#allocation4 + %s55]]
        %s286 = smul.u32 16, %s284
        %s287 = sld [smem:[#allocation4 + %s55]]
        %p288 = scmp.lt.s32.totalorder %s287, 1
        %s289 = scalar_select %p288, %s287, 1
        %s290 = scalar_lea.vmem %s7, %s289
        %s291 = sld [smem:[#allocation4 + %s55]]
        %s292 = sld [smem:[#allocation4 + %s55]]
        %p293 = scmp.lt.s32.totalorder %s54, 0
        %s294 = scalar_select %p293, %s54, 0
        %p295 = scmp.lt.s32.totalorder %s292, 1
        %s296 = scalar_select %p295, %s292, 1
        %s297 = smul.addr %s294, 2
        %s298 = sadd.s32 %s296, %s297
        %s299 = smul.addr %s298, 8
        %s300 = scalar_lea.vmem %s8, %s299
        %s301 = sld [smem:[#allocation4 + %s55]]
        %s302 = sld [smem:[#allocation6 + %s55]]
        %p303 = scmp.eq.s32.totalorder %s302, 1
        // Predicated region
        $region37: #{_lambda_.1} parent=31 // pred_check
          %p304 = pneg %p303
        $region38: #{_lambda_.1} parent=31 // pred_check_branch
          %306 = sbr.rel (%p304) target = $region40
        $region39: #{_lambda_.1} parent=31 // pred_region
          %307 = vst [vmem:[#allocation2] sm:$0xff] 0.0
        $region40: #{_lambda_.1} parent=31 // pred_fallthru
          _
        %s308 = sld [smem:[#allocation8 + %s55]]
        %p309 = scmp.eq.s32.totalorder %s308, 1
        // Predicated region
        $region41: #{_lambda_.1} parent=31 // pred_check
          %p310 = pneg %p309
        $region42: #{_lambda_.1} parent=31 // pred_check_branch
          %312 = sbr.rel (%p310) target = $region44
        $region43: #{_lambda_.1} parent=31 // pred_region
          %s313 = sld [smem:[#allocation5 + %s55]]
          %s314 = smul.addr %s313, 4
          %s315 = scalar_lea.vmem %s283, %s314
          %v316 = vld [vmem:[%s315] sm:$0xf]
          %v317 = vld [vmem:[#allocation2] sm:$0xff]
          %v318 = vld [vmem:[%s244] sm:$0xf]
          %v319 = vld [vmem:[%s244 + $0x4] sm:$0xf]
          %v320 = vld [vmem:[%s244 + $0x8] sm:$0xf]
          %v321 = vld [vmem:[%s244 + $0xc] sm:$0xf]
          %v322 = vld [vmem:[%s244 + $0x10] sm:$0xf]
          %v323 = vld [vmem:[%s244 + $0x14] sm:$0xf]
          %v324 = vld [vmem:[%s244 + $0x18] sm:$0xf]
          %v325 = vld [vmem:[%s244 + $0x1c] sm:$0xf]
          %v326 = vld [vmem:[%s244 + $0x20] sm:$0xf]
          %v327 = vld [vmem:[%s244 + $0x24] sm:$0xf]
          %v328 = vld [vmem:[%s244 + $0x28] sm:$0xf]
          %v329 = vld [vmem:[%s244 + $0x2c] sm:$0xf]
          %v330 = vld [vmem:[%s244 + $0x30] sm:$0xf]
          %v331 = vld [vmem:[%s244 + $0x34] sm:$0xf]
          %v332 = vld [vmem:[%s244 + $0x38] sm:$0xf]
          %v333 = vld [vmem:[%s244 + $0x3c] sm:$0xf]
          %v350 = vunpack.c.l.b16 %v318
          %v351 = vunpack.c.l.b16 %v319
          %v352 = vunpack.c.l.b16 %v320
          %v353 = vunpack.c.l.b16 %v321
          %v354 = vunpack.c.l.b16 %v322
          %v355 = vunpack.c.l.b16 %v323
          %v356 = vunpack.c.l.b16 %v324
          %v357 = vunpack.c.l.b16 %v325
          %v358 = vunpack.c.l.b16 %v326
          %v359 = vunpack.c.l.b16 %v327
          %v360 = vunpack.c.l.b16 %v328
          %v361 = vunpack.c.l.b16 %v329
          %v362 = vunpack.c.l.b16 %v330
          %v363 = vunpack.c.l.b16 %v331
          %v364 = vunpack.c.l.b16 %v332
          %v365 = vunpack.c.l.b16 %v333
          %v366 = vpack.c.b16 %v351, %v350
          %v367 = vpack.c.b16 %v353, %v352
          %v368 = vpack.c.b16 %v355, %v354
          %v369 = vpack.c.b16 %v357, %v356
          %v370 = vpack.c.b16 %v359, %v358
          %v371 = vpack.c.b16 %v361, %v360
          %v372 = vpack.c.b16 %v363, %v362
          %v373 = vpack.c.b16 %v365, %v364
          %382 = vmatpush.bf16.msra.mxu0 %v373
          %383 = vmatpush.bf16.msra.mxu0 %v372
          %384 = vmatpush.bf16.msra.mxu0 %v371
          %385 = vmatpush.bf16.msra.mxu0 %v370
          %386 = vmatpush.bf16.msra.mxu0 %v369
          %387 = vmatpush.bf16.msra.mxu0 %v368
          %388 = vmatpush.bf16.msra.mxu0 %v367
          %389 = vmatpush.bf16.msra.mxu0 %v366
          %390 = vmatmul.bf16.gmra.mxu0 %v316
          %v391 = vpop.f32.mrf.mxu0
          %v392 = vadd.f32 0.0, %v391
          %v393 = vpop.f32.mrf.mxu0
          %394 = vdwg.mxu0
          %v395 = vadd.f32 %v317, %v392
          %396 = vst [vmem:[#allocation2] sm:$0xff] %v395
        $region44: #{_lambda_.1} parent=31 // pred_fallthru
          _
        %s397 = sld [smem:[#allocation7 + %s55]]
        %p398 = scmp.eq.s32.totalorder %s397, 1
        // Predicated region
        $region45: #{_lambda_.1} parent=31 // pred_check
          %p399 = pneg %p398
        $region46: #{_lambda_.1} parent=31 // pred_check_branch
          %401 = sbr.rel (%p399) target = $region48
        $region47: #{_lambda_.1} parent=31 // pred_region
          %v402 = vld [vmem:[#allocation2] sm:$0xff]
          %v403 = vld [vmem:[%s290] sm:$0x1]
          %v405 = vperm.slane %v403, 0
          %v407 = vadd.f32 %v402, %v405
          %408 = vst [vmem:[%s300] sm:$0xff] %v407
        $region48: #{_lambda_.1} parent=31 // pred_fallthru
          _
        %s409 = sld [smem:[#allocation4 + %s55]]
        %p410 = scmp.lt.s32.totalorder %s54, 0
        %s411 = scalar_select %p410, %s54, 0
        %p412 = scmp.lt.s32.totalorder %s409, 1
        %s413 = scalar_select %p412, %s409, 1
        %s414 = smul.addr %s411, 2
        %s415 = sadd.s32 %s413, %s414
        %s416 = smul.addr %s415, 8
        %s417 = scalar_lea.vmem %s8, %s416
        // Predicated region
        $region49: #{_lambda_.1} parent=31 // pred_check
          %p418 = pneg %p170
        $region50: #{_lambda_.1} parent=31 // pred_check_branch
          %420 = sbr.rel (%p418) target = $region52
        $region51: #{_lambda_.1} parent=31 // pred_region
          %s421 = sld [smem:[#allocation4 + %s55]]
        $region52: #{_lambda_.1} parent=31 // pred_fallthru
          _
      $region32: #{_lambda_.1} parent=5 // pred_fallthru
        _
      %p422 = scmp.le.s32.totalorder 2, %s45
      // Predicated region
      $region53: #{_lambda_.1} parent=5 // pred_check
        %p423 = pneg %p422
      $region54: #{_lambda_.1} parent=5 // pred_check_branch
        %425 = sbr.rel (%p423) target = $region56
      $region55: #{_lambda_.1} parent=5 // pred_region
        %s426 = ssub.s32 %s45, 2
        // Predicated region
        $region57: #{_lambda_.1} parent=55 // pred_check
          %p427 = pneg %p176
        $region58: #{_lambda_.1} parent=55 // pred_check_branch
          %429 = sbr.rel (%p427) target = $region60
        $region59: #{_lambda_.1} parent=55 // pred_region
          %s430 = sld [smem:[#allocation4 + %s57]]
          %p431 = scmp.lt.s32.totalorder %s56, 0
          %s432 = scalar_select %p431, %s56, 0
          %p433 = scmp.lt.s32.totalorder %s430, 1
          %s434 = scalar_select %p433, %s430, 1
          %s435 = smul.addr %s432, 2
          %s436 = sadd.s32 %s434, %s435
          %s437 = smul.addr %s436, 8
          %s438 = scalar_lea.vmem %s8, %s437
        $region60: #{_lambda_.1} parent=55 // pred_fallthru
          _
      $region56: #{_lambda_.1} parent=5 // pred_fallthru
        _
    $region6: #{_lambda_.1} parent=1 // loop_footer
      %s49 = sadd.s32 1, %s45
    $region7: #{_lambda_.1} parent=1 // loop_footer_branch
      %44 = sbr.rel target = $region3
    $region8: #{_lambda_.1} parent=1 // loop_exit
      _
    %439 = vsyncpa [#allocation10], 1
    %s440 = scalar_lea.sflag [#allocation10], 1
    %441 = vsyncpa %s440, 1

</llo_original>
